<compile_context>
chip_gen: v6e
topology: v6e:2x2x1
jax: 0.10.0
libtpu: 0.0.40
codegen_flags: <defaults>
</compile_context>

<pallas_src>
import functools

import jax
import jax.numpy as jnp
from jax.experimental import pallas as pl
from jax.experimental.pallas import tpu as pltpu

EPS = 1e-6  # nn.LayerNorm-style: biased variance, eps inside sqrt


def _round_up(x, m):
    return ((x + m - 1) // m) * m


def _pad2d(a, rows, cols):
    r, c = a.shape
    if r == rows and c == cols:
        return a
    return jnp.pad(a, ((0, rows - r), (0, cols - c)))


def _vmem_budget_bytes():
    """Per-TensorCore VMEM budget used to size tiles and vmem_limit_bytes."""
    cap = None
    try:
        cap = int(pltpu.get_tpu_info().vmem_capacity_bytes)
    except Exception:
        cap = None
    kind = ""
    try:
        kind = jax.devices()[0].device_kind.lower()
    except Exception:
        pass
    if cap is None or cap <= 0:
        if ("v5" in kind) or ("v6" in kind):
            cap = 128 << 20
        else:
            cap = 64 << 20          # conservative default
    if "v7" in kind:
        cap = min(cap, 64 << 20)    # v7x: 64 MiB per TensorCore
    return cap


def sublayer_kernel(x_ref, w1_ref, b1_ref, w2_ref, vecs_ref, o_ref, *scratch,
                    d_true, need_mask, multi_k):
    """One (row-tile, dff-tile) grid step of LayerNorm(x + FFN(x))."""

    def finalize(ffn_out):
        # Dropout is identity at inference; residual + LayerNorm in f32.
        # Padded lanes of x / ffn_out / b2 are all exactly zero by construction,
        # so the mean is correct; only the variance needs lane masking.
        v = vecs_ref[...]                              # [3, Dp]: b2, gamma, beta
        r = x_ref[...].astype(jnp.float32) + ffn_out + v[0:1, :]
        inv_d = 1.0 / d_true
        mean = jnp.sum(r, axis=-1, keepdims=True) * inv_d
        c = r - mean
        sq = c * c
        if need_mask:  # exclude lane padding from the variance
            lane = jax.lax.broadcasted_iota(jnp.int32, r.shape, 1)
            sq = jnp.where(lane < d_true, sq, 0.0)
        var = jnp.sum(sq, axis=-1, keepdims=True) * inv_d
        norm = c * jax.lax.rsqrt(var + EPS)
        o_ref[...] = (norm * v[1:2, :] + v[2:3, :]).astype(o_ref.dtype)

    if multi_k:
        acc_ref, xbf_ref = scratch
        k = pl.program_id(1)

        # Hoist the bf16 cast of x: do it once per row tile (k == 0).
        @pl.when(k == 0)
        def _():
            xbf_ref[...] = x_ref[...].astype(jnp.bfloat16)

        x_bf = xbf_ref[...]
    else:
        x_bf = x_ref[...].astype(jnp.bfloat16)

    # FFN: bf16 operands on the MXU, f32 accumulation.
    # (bf16 bias-add/ReLU would shave a bit more on v6e/v7x VPUs, kept f32 for
    #  uniform v5e behavior since the MXU is the binding unit here.)
    h = jnp.dot(x_bf, w1_ref[...], preferred_element_type=jnp.float32)
    h = jnp.maximum(h + b1_ref[...], 0.0)                       # [TM, TF]
    y = jnp.dot(h.astype(jnp.bfloat16), w2_ref[...],
                preferred_element_type=jnp.float32)             # [TM, Dp]

    if multi_k:
        @pl.when(k == 0)
        def _():
            acc_ref[...] = y            # direct write: no zero-init + RMW

        @pl.when(k > 0)
        def _():
            acc_ref[...] += y

        @pl.when(k == pl.num_programs(1) - 1)
        def _():
            finalize(acc_ref[...])
    else:
        finalize(y)                     # resident weights: single pass, no acc


def sublayer_forward(x, w1, b1, w2, b2, gamma, beta, *,
                     tile_rows=None, dff_tile=1024, force_stream_weights=False):
    """x: [B, S, D]. Returns LayerNorm(x + FFN(x)) with shape [B, S, D]."""
    B, S, D = x.shape
    D_ff = w1.shape[1]
    N = B * S
    itemsize_out = jnp.dtype(x.dtype).itemsize

    budget = _vmem_budget_bytes()

    d_pad = _round_up(D, 128)
    dff_full = _round_up(D_ff, 128)

    # ---- weight residency decision (bf16 W1+W2, double-buffered) ----------
    weight_bytes_db = 2 * (2 * d_pad * dff_full * 2)
    resident = (not force_stream_weights) and (weight_bytes_db <= budget // 3)

    if resident:
        tf = dff_full                       # k axis collapses to 1
    else:
        # Stream D_ff in large contiguous slabs (tf >= 512 preferred for DMA).
        tf_max = max(128, ((budget * 35 // 100) // (8 * d_pad)) // 128 * 128)
        tf = max(128, min(_round_up(dff_tile, 128), dff_full, tf_max))
    dff_pad = _round_up(D_ff, tf)
    K = dff_pad // tf
    multi_k = K > 1

    # ---- row tile sizing from the VMEM budget ------------------------------
    weight_tile_bytes = 8 * d_pad * tf + 2 * (tf + 8 * d_pad) * 4
    row_bytes_per_tm = d_pad * (8 + 2 * itemsize_out) + tf * 4
    if multi_k:
        row_bytes_per_tm += d_pad * 6       # f32 acc + bf16 x scratch
    row_budget = (budget * 70) // 100 - weight_tile_bytes
    tm_cap = max(8, row_budget // max(row_bytes_per_tm, 1))

    tm_target = tile_rows if tile_rows is not None else min(1024, tm_cap)
    tm_target = max(8, (int(tm_target) // 8) * 8)
    if tm_target >= 256:
        tm_target = (tm_target // 128) * 128
    tm = min(tm_target, _round_up(N, 8))
    # Megacore (v7x has 2 TensorCores): keep >= 2 row blocks when N allows.
    if N > 8 and _round_up(N, tm) // tm < 2:
        tm = max(8, _round_up(_round_up(N, 16) // 2, 8))
    n_pad = _round_up(N, tm)
    n_row_blocks = n_pad // tm

    # ---- operand preparation (skip no-op pads / casts) ---------------------
    x2 = x.reshape(N, D)
    if x2.dtype != jnp.float32:
        x2 = x2.astype(jnp.float32)
    if (n_pad, d_pad) != (N, D):
        x2 = jnp.pad(x2, ((0, n_pad - N), (0, d_pad - D)))

    w1p = _pad2d(jnp.asarray(w1, jnp.float32), d_pad, dff_pad).astype(jnp.bfloat16)
    w2p = _pad2d(jnp.asarray(w2, jnp.float32), dff_pad, d_pad).astype(jnp.bfloat16)
    # Pre-block weights into contiguous per-k slabs (no strided W1 tile DMA).
    if K == 1:
        w1b = w1p.reshape(1, d_pad, dff_pad)
    else:
        w1b = w1p.reshape(d_pad, K, tf).transpose(1, 0, 2)      # [K, Dp, TF]
    w2b = w2p.reshape(K, tf, d_pad)                             # [K, TF, Dp]

    b1p = _pad2d(jnp.asarray(b1, jnp.float32).reshape(1, D_ff), 1, dff_pad)
    vecs = jnp.concatenate([
        _pad2d(jnp.asarray(b2, jnp.float32).reshape(1, D), 1, d_pad),
        _pad2d(jnp.asarray(gamma, jnp.float32).reshape(1, D), 1, d_pad),
        _pad2d(jnp.asarray(beta, jnp.float32).reshape(1, D), 1, d_pad),
    ], axis=0)                                                  # [3, Dp]

    scratch_shapes = []
    if multi_k:
        scratch_shapes = [pltpu.VMEM((tm, d_pad), jnp.float32),   # f32 accumulator
                          pltpu.VMEM((tm, d_pad), jnp.bfloat16)]  # hoisted bf16 x

    # ---- explicit VMEM budget (no hard 64 MiB clamp; capped at chip budget) -
    est = (2 * tm * d_pad * 4                       # x tiles (f32, double-buf)
           + 2 * tm * d_pad * itemsize_out          # out tiles
           + 8 * d_pad * tf                         # W1 + W2 tiles (bf16, x2)
           + tm * tf * 4                            # h intermediate
           + 4 * (8 * d_pad + tf) * 4)              # b1 / vecs buffers
    if multi_k:
        est += tm * d_pad * (4 + 2)                 # acc + bf16 x scratch
    vmem_limit = int(min(budget, max(est + (16 << 20), 32 << 20)))

    weight_stream_passes = n_row_blocks if multi_k else 1
    cost = pl.CostEstimate(
        flops=4 * N * D * D_ff,
        transcendentals=N,
        bytes_accessed=int(N * D * (4 + itemsize_out)
                           + 2 * (D * D_ff + D_ff * D) * weight_stream_passes))

    kernel = functools.partial(sublayer_kernel, d_true=int(D),
                               need_mask=(d_pad != D), multi_k=multi_k)

    out = pl.pallas_call(
        kernel,
        out_shape=jax.ShapeDtypeStruct((n_pad, d_pad), x.dtype),
        grid_spec=pltpu.PrefetchScalarGridSpec(
            num_scalar_prefetch=0,
            grid=(n_row_blocks, K),
            in_specs=[
                pl.BlockSpec((tm, d_pad), lambda i, k: (i, 0)),          # x tile
                pl.BlockSpec((None, d_pad, tf), lambda i, k: (k, 0, 0)),  # W1 slab
                pl.BlockSpec((1, tf), lambda i, k: (0, k)),              # b1 tile
                pl.BlockSpec((None, tf, d_pad), lambda i, k: (k, 0, 0)),  # W2 slab
                pl.BlockSpec((3, d_pad), lambda i, k: (0, 0)),           # b2/g/beta
            ],
            out_specs=pl.BlockSpec((tm, d_pad), lambda i, k: (i, 0)),
            scratch_shapes=scratch_shapes),
        compiler_params=pltpu.CompilerParams(
            dimension_semantics=("parallel", "arbitrary"),
            vmem_limit_bytes=vmem_limit),
        cost_estimate=cost,
    )(x2, w1b, b1p, w2b, vecs)

    if (n_pad, d_pad) != (N, D):
        out = out[:N, :D]
    return out.reshape(B, S, D)


def _reference(x, w1, b1, w2, b2, gamma, beta):
    """Plain-JAX reference mirroring the kernel's bf16 matmul inputs."""
    B, S, D = x.shape
    x2 = x.reshape(-1, D)
    xb = x2.astype(jnp.bfloat16)
    h = jnp.maximum(
        jnp.dot(xb, w1.astype(jnp.bfloat16),
                preferred_element_type=jnp.float32) + b1, 0.0)
    y = jnp.dot(h.astype(jnp.bfloat16), w2.astype(jnp.bfloat16),
                preferred_element_type=jnp.float32) + b2
    r = x2 + y
    mu = r.mean(-1, keepdims=True)
    var = ((r - mu) ** 2).mean(-1, keepdims=True)
    return ((r - mu) / jnp.sqrt(var + EPS) * gamma + beta).reshape(B, S, D)


if __name__ == "__main__":
    # Small shapes consistent with the module: batch=2, seq=8, hidden=32, d_ff=64
    B, S, D, D_ff = 2, 8, 32, 64
    key = jax.random.PRNGKey(0)
    kx, kw1, kb1, kw2, kb2 = jax.random.split(key, 5)

    x = jax.random.normal(kx, (B, S, D), dtype=jnp.float32)

    # Deterministic synthetic parameters (not a checkpoint load)
    w1 = jax.random.normal(kw1, (D, D_ff), dtype=jnp.float32) * 0.05
    b1 = jax.random.normal(kb1, (1, D_ff), dtype=jnp.float32) * 0.01
    w2 = jax.random.normal(kw2, (D_ff, D), dtype=jnp.float32) * 0.05
    b2 = jax.random.normal(kb2, (1, D), dtype=jnp.float32) * 0.01
    gamma = jnp.ones((1, D), dtype=jnp.float32)   # LayerNorm scale (a_2)
    beta = jnp.zeros((1, D), dtype=jnp.float32)   # LayerNorm shift (b_2)

    # 1) Default path: resident weights (K == 1).
    out = sublayer_forward(x, w1, b1, w2, b2, gamma, beta)
    jax.block_until_ready(out)
    ref = _reference(x, w1, b1, w2, b2, gamma, beta)
    assert jnp.allclose(out, ref, atol=1e-4, rtol=1e-4), "mismatch (resident path)"

    # 2) Streamed-weight (multi-k accumulator) path, forced at small shapes.
    D_ff2 = 256
    w1s = jax.random.normal(kw1, (D, D_ff2), dtype=jnp.float32) * 0.05
    b1s = jax.random.normal(kb1, (1, D_ff2), dtype=jnp.float32) * 0.01
    w2s = jax.random.normal(kw2, (D_ff2, D), dtype=jnp.float32) * 0.05
    out2 = sublayer_forward(x, w1s, b1s, w2s, b2, gamma, beta,
                            dff_tile=128, force_stream_weights=True)
    jax.block_until_ready(out2)
    ref2 = _reference(x, w1s, b1s, w2s, b2, gamma, beta)
    assert jnp.allclose(out2, ref2, atol=1e-4, rtol=1e-4), "mismatch (streamed path)"

    print("KERNEL_OK")
</pallas_src>

<mosaic_0001>
module attributes {stable_mosaic.version = 11 : i64} {
  func.func @sublayer_kernel(%arg0: i32, %arg1: i32, %arg2: memref<8x128xf32, #tpu.memory_space<vmem>>, %arg3: memref<1x128x128xbf16, #tpu.memory_space<vmem>>, %arg4: memref<1x128xf32, #tpu.memory_space<vmem>>, %arg5: memref<1x128x128xbf16, #tpu.memory_space<vmem>>, %arg6: memref<3x128xf32, #tpu.memory_space<vmem>>, %arg7: memref<8x128xf32, #tpu.memory_space<vmem>>) attributes {dimension_semantics = [#tpu.dimension_semantics<parallel>, #tpu.dimension_semantics<arbitrary>], iteration_bounds = array<i64: 2, 1>, scalar_prefetch = 0 : i64, scratch_operands = 0 : i64, tpu.core_type = #tpu.core_type<tc>, window_params = [{transform_indices = @transform_0, window_bounds = array<i64: 8, 128>}, {transform_indices = @transform_1, window_bounds = array<i64: 1, 128, 128>}, {transform_indices = @transform_2, window_bounds = array<i64: 1, 128>}, {transform_indices = @transform_3, window_bounds = array<i64: 1, 128, 128>}, {pipeline_mode = #tpu.pipeline_mode<synchronous>, transform_indices = @transform_4, window_bounds = array<i64: 3, 128>}, {transform_indices = @transform_5, window_bounds = array<i64: 8, 128>}]} {
    %c0 = arith.constant 0 : index
    %c0_0 = arith.constant 0 : index
    %0 = vector.load %arg2[%c0, %c0_0] : memref<8x128xf32, #tpu.memory_space<vmem>>, vector<8x128xf32>
    %1 = arith.truncf %0 : vector<8x128xf32> to vector<8x128xbf16>
    %c0_1 = arith.constant 0 : index
    %c0_2 = arith.constant 0 : index
    %c0_3 = arith.constant 0 : index
    %2 = vector.load %arg3[%c0_1, %c0_2, %c0_3] : memref<1x128x128xbf16, #tpu.memory_space<vmem>>, vector<1x128x128xbf16>
    %3 = vector.shape_cast %2 : vector<1x128x128xbf16> to vector<128x128xbf16>
    %cst = arith.constant dense<0.000000e+00> : vector<8x128xf32>
    %4 = tpu.matmul %1, %3, %cst {dimension_numbers = #tpu.dot_dimension_numbers<[1], [0], [0], [1], [0, 0, 1, 1], [], []>} : vector<8x128xbf16>, vector<128x128xbf16>, vector<8x128xf32> -> vector<8x128xf32>
    %c0_4 = arith.constant 0 : index
    %c0_5 = arith.constant 0 : index
    %5 = vector.load %arg4[%c0_4, %c0_5] : memref<1x128xf32, #tpu.memory_space<vmem>>, vector<1x128xf32>
    %6 = vector.broadcast %5 : vector<1x128xf32> to vector<8x128xf32>
    %7 = arith.addf %4, %6 : vector<8x128xf32>
    %cst_6 = arith.constant 0.000000e+00 : f32
    %8 = vector.broadcast %cst_6 : f32 to vector<8x128xf32>
    %9 = arith.maximumf %7, %8 : vector<8x128xf32>
    %10 = arith.truncf %9 : vector<8x128xf32> to vector<8x128xbf16>
    %c0_7 = arith.constant 0 : index
    %c0_8 = arith.constant 0 : index
    %c0_9 = arith.constant 0 : index
    %11 = vector.load %arg5[%c0_7, %c0_8, %c0_9] : memref<1x128x128xbf16, #tpu.memory_space<vmem>>, vector<1x128x128xbf16>
    %12 = vector.shape_cast %11 : vector<1x128x128xbf16> to vector<128x128xbf16>
    %cst_10 = arith.constant dense<0.000000e+00> : vector<8x128xf32>
    %13 = tpu.matmul %10, %12, %cst_10 {dimension_numbers = #tpu.dot_dimension_numbers<[1], [0], [0], [1], [0, 0, 1, 1], [], []>} : vector<8x128xbf16>, vector<128x128xbf16>, vector<8x128xf32> -> vector<8x128xf32>
    %c0_11 = arith.constant 0 : index
    %c0_12 = arith.constant 0 : index
    %14 = vector.load %arg6[%c0_11, %c0_12] : memref<3x128xf32, #tpu.memory_space<vmem>>, vector<3x128xf32>
    %c0_13 = arith.constant 0 : index
    %c0_14 = arith.constant 0 : index
    %15 = vector.load %arg2[%c0_13, %c0_14] : memref<8x128xf32, #tpu.memory_space<vmem>>, vector<8x128xf32>
    %16 = arith.addf %15, %13 : vector<8x128xf32>
    %17 = vector.extract_strided_slice %14 {offsets = [0, 0], sizes = [1, 128], strides = [1, 1]} : vector<3x128xf32> to vector<1x128xf32>
    %18 = vector.broadcast %17 : vector<1x128xf32> to vector<8x128xf32>
    %19 = arith.addf %16, %18 : vector<8x128xf32>
    %cst_15 = arith.constant dense<0.000000e+00> : vector<8xf32>
    %20 = vector.multi_reduction <add>, %19, %cst_15 [1] : vector<8x128xf32> to vector<8xf32>
    %21 = vector.shape_cast %20 : vector<8xf32> to vector<8x1xf32>
    %cst_16 = arith.constant 3.125000e-02 : f32
    %22 = vector.broadcast %cst_16 : f32 to vector<8x1xf32>
    %23 = arith.mulf %21, %22 : vector<8x1xf32>
    %24 = vector.broadcast %23 : vector<8x1xf32> to vector<8x128xf32>
    %25 = arith.subf %19, %24 : vector<8x128xf32>
    %26 = arith.mulf %25, %25 : vector<8x128xf32>
    %27 = tpu.iota {dimensions = array<i32: 1>} : vector<8x128xi32>
    %c32_i32 = arith.constant 32 : i32
    %28 = vector.broadcast %c32_i32 : i32 to vector<8x128xi32>
    %29 = arith.cmpi slt, %27, %28 : vector<8x128xi32>
    %cst_17 = arith.constant 0.000000e+00 : f32
    %30 = vector.broadcast %cst_17 : f32 to vector<8x128xf32>
    %31 = arith.select %29, %26, %30 : vector<8x128xi1>, vector<8x128xf32>
    %cst_18 = arith.constant dense<0.000000e+00> : vector<8xf32>
    %32 = vector.multi_reduction <add>, %31, %cst_18 [1] : vector<8x128xf32> to vector<8xf32>
    %33 = vector.shape_cast %32 : vector<8xf32> to vector<8x1xf32>
    %cst_19 = arith.constant 3.125000e-02 : f32
    %34 = vector.broadcast %cst_19 : f32 to vector<8x1xf32>
    %35 = arith.mulf %33, %34 : vector<8x1xf32>
    %cst_20 = arith.constant 9.99999997E-7 : f32
    %36 = vector.broadcast %cst_20 : f32 to vector<8x1xf32>
    %37 = arith.addf %35, %36 : vector<8x1xf32>
    %38 = math.rsqrt %37 : vector<8x1xf32>
    %39 = vector.broadcast %38 : vector<8x1xf32> to vector<8x128xf32>
    %40 = arith.mulf %25, %39 : vector<8x128xf32>
    %41 = vector.extract_strided_slice %14 {offsets = [1, 0], sizes = [1, 128], strides = [1, 1]} : vector<3x128xf32> to vector<1x128xf32>
    %42 = vector.broadcast %41 : vector<1x128xf32> to vector<8x128xf32>
    %43 = arith.mulf %40, %42 : vector<8x128xf32>
    %44 = vector.extract_strided_slice %14 {offsets = [2, 0], sizes = [1, 128], strides = [1, 1]} : vector<3x128xf32> to vector<1x128xf32>
    %45 = vector.broadcast %44 : vector<1x128xf32> to vector<8x128xf32>
    %46 = arith.addf %43, %45 : vector<8x128xf32>
    %c0_21 = arith.constant 0 : index
    %c0_22 = arith.constant 0 : index
    %47 = vector.load %arg7[%c0_21, %c0_22] : memref<8x128xf32, #tpu.memory_space<vmem>>, vector<8x128xf32>
    tpu.vector_store %arg7[%c0_21, %c0_22], %46 {strides = array<i32>} : memref<8x128xf32, #tpu.memory_space<vmem>>, vector<8x128xf32>,
    return
  }
  func.func @transform_0(%arg0: i32, %arg1: i32) -> (i32, i32) {
    %c0_i32 = arith.constant 0 : i32
    %c0_i32_0 = arith.constant 0 : i32
    return %arg0, %c0_i32 : i32, i32
  }
  func.func @transform_1(%arg0: i32, %arg1: i32) -> (i32, i32, i32) {
    %c0_i32 = arith.constant 0 : i32
    %c0_i32_0 = arith.constant 0 : i32
    %c0_i32_1 = arith.constant 0 : i32
    return %arg1, %c0_i32, %c0_i32_0 : i32, i32, i32
  }
  func.func @transform_2(%arg0: i32, %arg1: i32) -> (i32, i32) {
    %c0_i32 = arith.constant 0 : i32
    %c0_i32_0 = arith.constant 0 : i32
    return %c0_i32, %arg1 : i32, i32
  }
  func.func @transform_3(%arg0: i32, %arg1: i32) -> (i32, i32, i32) {
    %c0_i32 = arith.constant 0 : i32
    %c0_i32_0 = arith.constant 0 : i32
    %c0_i32_1 = arith.constant 0 : i32
    return %arg1, %c0_i32, %c0_i32_0 : i32, i32, i32
  }
  func.func @transform_4(%arg0: i32, %arg1: i32) -> (i32, i32) {
    %c0_i32 = arith.constant 0 : i32
    %c0_i32_0 = arith.constant 0 : i32
    %c0_i32_1 = arith.constant 0 : i32
    return %c0_i32, %c0_i32_0 : i32, i32
  }
  func.func @transform_5(%arg0: i32, %arg1: i32) -> (i32, i32) {
    %c0_i32 = arith.constant 0 : i32
    %c0_i32_0 = arith.constant 0 : i32
    return %arg0, %c0_i32 : i32, i32
  }
}

</mosaic_0001>

<llo_original>
// kernel: tpu_custom_call.1
$region0: #{tpu_custom_call.1}
  #allocation0 [shape = 'u32[]', space=smem, size = 0x4, offset = 0x4, fixed_abs, tag = 'smem constant byte address 0x4 - core index']
  #allocation1 [shape = 'u32[144,128]{1,0:T(1,128)}', space=vmem, size = 0x12000, scoped, tag = 'internal scratch']
  %s0 = inlined_call_operand.hbm [shape: f32[16,128], index: 0, kind: input, shape index: {}]
  %s1 = inlined_call_operand.hbm [shape: bf16[1,128,128], index: 1, kind: input, shape index: {}]
  %s2 = inlined_call_operand.vmem [shape: f32[1,128], index: 2, kind: input, shape index: {}]
  %s3 = inlined_call_operand.hbm [shape: bf16[1,128,128], index: 3, kind: input, shape index: {}]
  %s4 = inlined_call_operand.vmem [shape: f32[3,128], index: 4, kind: input, shape index: {}]
  %s5 = inlined_call_operand.hbm [shape: f32[16,128], index: 5, kind: output, shape index: {}]
  %s6 = sld [smem:[#allocation0]]
  $region65: #{tpu_custom_call.1} parent=0
    _
  %s8 = ssub.s32 1, %s6
  %s9 = scalar_select 0, %s8, %s6
  $region1: #{tpu_custom_call.1} parent=0
    #allocation2 [shape = 'u8[8192]{0}', space=vmem, size = 0x2000, scoped, tag = 'input window, operand 0']
    #allocation3 [shape = 's32[2]{0}', space=sflag, size = 0x8, scoped, tag = 'scoped memory for tpu_custom_call.1']
    #allocation4 [shape = 's32[2]{0}', space=sflag, size = 0x8, scoped, tag = 'scoped memory for tpu_custom_call.1']
    #allocation5 [shape = 'u8[32768]{0}', space=vmem, size = 0x8000, scoped, tag = 'input window, operand 1, single buffered']
    #allocation6 [shape = 's32[1]{0}', space=sflag, size = 0x4, scoped, tag = 'scoped memory for tpu_custom_call.1']
    #allocation7 [shape = 'u8[32768]{0}', space=vmem, size = 0x8000, scoped, tag = 'input window, operand 3, single buffered']
    #allocation8 [shape = 'u8[8192]{0}', space=vmem, size = 0x2000, scoped, tag = 'output window, operand 0']
    %10 = vsyncpa [#allocation3], 0
    %s11 = scalar_lea.sflag [#allocation3], 1
    %12 = vsyncpa %s11, 0
    %13 = vsyncpa [#allocation6], 0
    %14 = vsyncpa [#allocation4], 0
    %s15 = scalar_lea.sflag [#allocation4], 1
    %16 = vsyncpa %s15, 0
    loop: start=0, step=1, limit=4
    $region2: #{tpu_custom_call.1} parent=1 // loop_pre_header
      _
    $region3: #{tpu_custom_call.1} parent=1 // loop_header
      %s18 = sphi 0, %s22
      %p19 = scmp.ge.s32.totalorder %s18, 4
      %s25 = sphi 0, %s37
      %s26 = sphi 0, %s33
      %s27 = sphi 0, %s25
      %s28 = sphi 0, %s26
      %s29 = sphi 0, %s27
      %s30 = sphi 0, %s28
      %s40 = sphi 0, %s42
      %s43 = sphi 0, %s40
      %s44 = sphi 0, %s43
      %s60 = sphi 0, %s44
      %s66 = sphi 0, %s68
      %s69 = sphi 0, %s66
      %s70 = sphi 0, %s69
      %s86 = sphi 0, %s70
      %s92 = sphi 0, %s94
      %s95 = sphi 0, %s92
      %s96 = sphi 0, %s95
      %s112 = sphi 0, %s96
      %s118 = sphi 0, %s120
      %s121 = sphi 0, %s118
      %s122 = sphi 0, %s121
      %s138 = sphi 0, %s122
      %s142 = sphi 0, %s142
      %s144 = sphi 0, %s142
      %s145 = sphi 0, %s144
      %s159 = sphi 0, %s145
      %s165 = sphi 0, %s167
      %s168 = sphi 0, %s165
      %s169 = sphi 0, %s168
      %s185 = sphi 0, %s169
    $region4: #{tpu_custom_call.1} parent=1 // loop_header_branch
      %21 = sbr.rel (%p19) target = $region8
    $region5: #{tpu_custom_call.1} parent=1 // loop_body
      %s23 = ssub.s32 %s18, 1
      %s24 = ssub.s32 %s18, 2
      %s31 = sadd.s32 1, %s26
      %p32 = scmp.ge.s32.totalorder %s31, 1
      %s33 = scalar_select %p32, 0, %s31
      %s34 = sadd.s32 1, %s25
      %s35 = scalar_select %p32, %s34, %s25
      %p36 = scmp.ge.s32.totalorder %s35, 2
      %s37 = scalar_select %p36, 0, %s35
      %s38 = ssub.s32 %s25, %s37
      %p39 = scmp.eq.s32.totalorder %s38, 0
      %s41 = sadd.s32 %s40, 1
      %s42 = scalar_select %p39, %s40, %s41
      %p45 = pneg %p39
      %p46 = scmp.eq.s32.totalorder %s18, 1
      %p47 = por %p45, %p46
      %p48 = scmp.ne.s32.totalorder %s40, %s43
      %p49 = scmp.eq.s32.totalorder %s18, 0
      %p50 = por %p48, %p49
      %p51 = scmp.ne.s32.totalorder %s40, %s43
      %p52 = scmp.eq.s32.totalorder %s23, 1
      %p53 = por %p51, %p52
      %p54 = scmp.ne.s32.totalorder %s43, %s44
      %p55 = scmp.eq.s32.totalorder %s23, 0
      %p56 = por %p54, %p55
      %p57 = scmp.ne.s32.totalorder %s43, %s44
      %p58 = scmp.eq.s32.totalorder %s24, 1
      %p59 = por %p57, %p58
      %p61 = scmp.ne.s32.totalorder %s44, %s60
      %p62 = scmp.eq.s32.totalorder %s24, 0
      %p63 = por %p61, %p62
      %s64 = ssub.s32 %s26, %s33
      %p65 = scmp.eq.s32.totalorder %s64, 0
      %s67 = sadd.s32 %s66, 1
      %s68 = scalar_select %p65, %s66, %s67
      %p71 = pneg %p65
      %p72 = scmp.eq.s32.totalorder %s18, 1
      %p73 = por %p71, %p72
      %p74 = scmp.ne.s32.totalorder %s66, %s69
      %p75 = scmp.eq.s32.totalorder %s18, 0
      %p76 = por %p74, %p75
      %p77 = scmp.ne.s32.totalorder %s66, %s69
      %p78 = scmp.eq.s32.totalorder %s23, 1
      %p79 = por %p77, %p78
      %p80 = scmp.ne.s32.totalorder %s69, %s70
      %p81 = scmp.eq.s32.totalorder %s23, 0
      %p82 = por %p80, %p81
      %p83 = scmp.ne.s32.totalorder %s69, %s70
      %p84 = scmp.eq.s32.totalorder %s24, 1
      %p85 = por %p83, %p84
      %p87 = scmp.ne.s32.totalorder %s70, %s86
      %p88 = scmp.eq.s32.totalorder %s24, 0
      %p89 = por %p87, %p88
      %s90 = ssub.s32 %s26, %s33
      %p91 = scmp.eq.s32.totalorder %s90, 0
      %s93 = sadd.s32 %s92, 1
      %s94 = scalar_select %p91, %s92, %s93
      %p97 = pneg %p91
      %p98 = scmp.eq.s32.totalorder %s18, 1
      %p99 = por %p97, %p98
      %p100 = scmp.ne.s32.totalorder %s92, %s95
      %p101 = scmp.eq.s32.totalorder %s18, 0
      %p102 = por %p100, %p101
      %p103 = scmp.ne.s32.totalorder %s92, %s95
      %p104 = scmp.eq.s32.totalorder %s23, 1
      %p105 = por %p103, %p104
      %p106 = scmp.ne.s32.totalorder %s95, %s96
      %p107 = scmp.eq.s32.totalorder %s23, 0
      %p108 = por %p106, %p107
      %p109 = scmp.ne.s32.totalorder %s95, %s96
      %p110 = scmp.eq.s32.totalorder %s24, 1
      %p111 = por %p109, %p110
      %p113 = scmp.ne.s32.totalorder %s96, %s112
      %p114 = scmp.eq.s32.totalorder %s24, 0
      %p115 = por %p113, %p114
      %s116 = ssub.s32 %s26, %s33
      %p117 = scmp.eq.s32.totalorder %s116, 0
      %s119 = sadd.s32 %s118, 1
      %s120 = scalar_select %p117, %s118, %s119
      %p123 = pneg %p117
      %p124 = scmp.eq.s32.totalorder %s18, 1
      %p125 = por %p123, %p124
      %p126 = scmp.ne.s32.totalorder %s118, %s121
      %p127 = scmp.eq.s32.totalorder %s18, 0
      %p128 = por %p126, %p127
      %p129 = scmp.ne.s32.totalorder %s118, %s121
      %p130 = scmp.eq.s32.totalorder %s23, 1
      %p131 = por %p129, %p130
      %p132 = scmp.ne.s32.totalorder %s121, %s122
      %p133 = scmp.eq.s32.totalorder %s23, 0
      %p134 = por %p132, %p133
      %p135 = scmp.ne.s32.totalorder %s121, %s122
      %p136 = scmp.eq.s32.totalorder %s24, 1
      %p137 = por %p135, %p136
      %p139 = scmp.ne.s32.totalorder %s122, %s138
      %p140 = scmp.eq.s32.totalorder %s24, 0
      %p141 = por %p139, %p140
      %s143 = sadd.s32 %s142, 1
      %p146 = scmp.eq.s32.totalorder %s18, 1
      %p147 = scmp.ne.s32.totalorder %s142, %s144
      %p148 = scmp.eq.s32.totalorder %s18, 0
      %p149 = por %p147, %p148
      %p150 = scmp.ne.s32.totalorder %s142, %s144
      %p151 = scmp.eq.s32.totalorder %s23, 1
      %p152 = por %p150, %p151
      %p153 = scmp.ne.s32.totalorder %s144, %s145
      %p154 = scmp.eq.s32.totalorder %s23, 0
      %p155 = por %p153, %p154
      %p156 = scmp.ne.s32.totalorder %s144, %s145
      %p157 = scmp.eq.s32.totalorder %s24, 1
      %p158 = por %p156, %p157
      %p160 = scmp.ne.s32.totalorder %s145, %s159
      %p161 = scmp.eq.s32.totalorder %s24, 0
      %p162 = por %p160, %p161
      %s163 = ssub.s32 %s25, %s37
      %p164 = scmp.eq.s32.totalorder %s163, 0
      %s166 = sadd.s32 %s165, 1
      %s167 = scalar_select %p164, %s165, %s166
      %p170 = pneg %p164
      %p171 = scmp.eq.s32.totalorder %s18, 1
      %p172 = por %p170, %p171
      %p173 = scmp.ne.s32.totalorder %s165, %s168
      %p174 = scmp.eq.s32.totalorder %s18, 0
      %p175 = por %p173, %p174
      %p176 = scmp.ne.s32.totalorder %s165, %s168
      %p177 = scmp.eq.s32.totalorder %s23, 1
      %p178 = por %p176, %p177
      %p179 = scmp.ne.s32.totalorder %s168, %s169
      %p180 = scmp.eq.s32.totalorder %s23, 0
      %p181 = por %p179, %p180
      %p182 = scmp.ne.s32.totalorder %s168, %s169
      %p183 = scmp.eq.s32.totalorder %s24, 1
      %p184 = por %p182, %p183
      %p186 = scmp.ne.s32.totalorder %s169, %s185
      %p187 = scmp.eq.s32.totalorder %s24, 0
      %p188 = por %p186, %p187
      %p189 = scmp.le.s32.totalorder 1, %s18
      %p190 = scmp.lt.s32.totalorder %s18, 3
      %p191 = pnand %p189, %p190
      %p192 = pneg %p191
      // Predicated region
      $region9: #{tpu_custom_call.1} parent=5 // pred_check
        _
      $region10: #{tpu_custom_call.1} parent=5 // pred_check_branch
        %194 = sbr.rel (%p191) target = $region12
      $region11: #{tpu_custom_call.1} parent=5 // pred_region
        %s195 = ssub.s32 %s18, 1
        // Predicated region
        $region13: #{tpu_custom_call.1} parent=11 // pred_check
          %p196 = pneg %p82
        $region14: #{tpu_custom_call.1} parent=11 // pred_check_branch
          %198 = sbr.rel (%p196) target = $region16
        $region15: #{tpu_custom_call.1} parent=11 // pred_region
          %s200 = ssub.s32 1024, 1024
          %201 = vsyncadd [#allocation6], %s200
          %s202 = smul.addr %s28, 16
          %s203 = smul.addr %s202, 64
          %s204 = scalar_lea.hbm %s1, %s203
          %s205 = sshll.u32 [#allocation5], 4
          %s206 = int_to_ptr.vmem [resolvable:$true] %s205
          %211 = dma.hbm_to_vmem [thread:$0]  %s204, 1024, %s206, [#allocation6], 64, 64, 4
        $region16: #{tpu_custom_call.1} parent=11 // pred_fallthru
          _
        // Predicated region
        $region17: #{tpu_custom_call.1} parent=11 // pred_check
          %p212 = pneg %p108
        $region18: #{tpu_custom_call.1} parent=11 // pred_check_branch
          %214 = sbr.rel (%p212) target = $region20
        $region19: #{tpu_custom_call.1} parent=11 // pred_region
          %p215 = scmp.lt.s32.totalorder %s28, 0
          %s216 = scalar_select %p215, %s28, 0
          %s217 = scalar_lea.vmem %s2, %s216
        $region20: #{tpu_custom_call.1} parent=11 // pred_fallthru
          _
        // Predicated region
        $region21: #{tpu_custom_call.1} parent=11 // pred_check
          %p218 = pneg %p134
        $region22: #{tpu_custom_call.1} parent=11 // pred_check_branch
          %220 = sbr.rel (%p218) target = $region24
        $region23: #{tpu_custom_call.1} parent=11 // pred_region
          %s222 = ssub.s32 1024, 1024
          %223 = vsyncadd [#allocation6], %s222
          %s224 = smul.addr %s28, 16
          %s225 = smul.addr %s224, 64
          %s226 = scalar_lea.hbm %s3, %s225
          %s227 = sshll.u32 [#allocation7], 4
          %s228 = int_to_ptr.vmem [resolvable:$true] %s227
          %233 = dma.hbm_to_vmem [thread:$0]  %s226, 1024, %s228, [#allocation6], 64, 64, 4
        $region24: #{tpu_custom_call.1} parent=11 // pred_fallthru
          _
        // Predicated region
        $region25: #{tpu_custom_call.1} parent=11 // pred_check
          %p234 = pneg %p155
        $region26: #{tpu_custom_call.1} parent=11 // pred_check_branch
          %236 = sbr.rel (%p234) target = $region28
        $region27: #{tpu_custom_call.1} parent=11 // pred_region
          _
        $region28: #{tpu_custom_call.1} parent=11 // pred_fallthru
          _
      $region12: #{tpu_custom_call.1} parent=5 // pred_fallthru
        _
      %p237 = scmp.lt.s32.totalorder %s18, 2
      // Predicated region
      $region29: #{tpu_custom_call.1} parent=5 // pred_check
        %p238 = pneg %p237
      $region30: #{tpu_custom_call.1} parent=5 // pred_check_branch
        %240 = sbr.rel (%p238) target = $region32
      $region31: #{tpu_custom_call.1} parent=5 // pred_region
        // Predicated region
        $region33: #{tpu_custom_call.1} parent=31 // pred_check
          %p241 = pneg %p50
        $region34: #{tpu_custom_call.1} parent=31 // pred_check_branch
          %243 = sbr.rel (%p241) target = $region36
        $region35: #{tpu_custom_call.1} parent=31 // pred_region
          %s244 = sand.u32 %s40, 1
          %s245 = scalar_lea.sflag [#allocation3], %s244
          %s246 = sand.u32 %s40, 1
          %s247 = smul.addr %s246, 8
          %s248 = scalar_lea.vmem [#allocation2], %s247
          %s250 = ssub.s32 128, 128
          %251 = vsyncadd %s245, %s250
          %s252 = smul.addr %s25, 128
          %s253 = scalar_lea.hbm %s0, %s252
          %s255 = sshll.u32 %s248, 4
          %s256 = int_to_ptr.vmem [resolvable:$true] %s255
          %258 = dma.hbm_to_vmem [thread:$0]  %s253, 128, %s256, %s245
        $region36: #{tpu_custom_call.1} parent=31 // pred_fallthru
          _
      $region32: #{tpu_custom_call.1} parent=5 // pred_fallthru
        _
      %p259 = scmp.le.s32.totalorder 1, %s18
      %p260 = scmp.lt.s32.totalorder %s18, 3
      %p261 = pnand %p259, %p260
      %p262 = pneg %p261
      // Predicated region
      $region37: #{tpu_custom_call.1} parent=5 // pred_check
        _
      $region38: #{tpu_custom_call.1} parent=5 // pred_check_branch
        %264 = sbr.rel (%p261) target = $region40
      $region39: #{tpu_custom_call.1} parent=5 // pred_region
        %s265 = ssub.s32 %s18, 1
        %s266 = sand.u32 %s43, 1
        %s267 = scalar_lea.sflag [#allocation3], %s266
        %s268 = sand.u32 %s43, 1
        %s269 = smul.addr %s268, 8
        %s270 = scalar_lea.vmem [#allocation2], %s269
        // Predicated region
        $region41: #{tpu_custom_call.1} parent=39 // pred_check
          %p271 = pneg %p56
        $region42: #{tpu_custom_call.1} parent=39 // pred_check_branch
          %273 = sbr.rel (%p271) target = $region44
        $region43: #{tpu_custom_call.1} parent=39 // pred_region
          %274 = dma.done %s267, 128
        $region44: #{tpu_custom_call.1} parent=39 // pred_fallthru
          _
        // Predicated region
        $region45: #{tpu_custom_call.1} parent=39 // pred_check
          %p275 = pneg %p82
        $region46: #{tpu_custom_call.1} parent=39 // pred_check_branch
          %277 = sbr.rel (%p275) target = $region48
        $region47: #{tpu_custom_call.1} parent=39 // pred_region
          %278 = dma.done [#allocation6], 1024
        $region48: #{tpu_custom_call.1} parent=39 // pred_fallthru
          _
        // Predicated region
        $region49: #{tpu_custom_call.1} parent=39 // pred_check
          %p279 = pneg %p134
        $region50: #{tpu_custom_call.1} parent=39 // pred_check_branch
          %281 = sbr.rel (%p279) target = $region52
        $region51: #{tpu_custom_call.1} parent=39 // pred_region
          %282 = dma.done [#allocation6], 1024
        $region52: #{tpu_custom_call.1} parent=39 // pred_fallthru
          _
        %s283 = sand.u32 %s43, 1
        %s284 = scalar_lea.sflag [#allocation3], %s283
        %s285 = sand.u32 %s43, 1
        %s286 = smul.addr %s285, 8
        %s287 = scalar_lea.vmem [#allocation2], %s286
        %p288 = pneg %p56
        %p289 = pneg %p53
        %p290 = pneg %p82
        %p291 = pneg %p79
        %p292 = scmp.lt.s32.totalorder %s28, 0
        %s293 = scalar_select %p292, %s28, 0
        %s294 = scalar_lea.vmem %s2, %s293
        %p295 = pneg %p108
        %p296 = pneg %p105
        %p297 = pneg %p134
        %p298 = pneg %p131
        %p299 = pneg %p155
        %p300 = pneg %p152
        %p301 = pneg %p181
        %p302 = pneg %p178
        %s303 = sand.u32 %s168, 1
        %s304 = scalar_lea.sflag [#allocation4], %s303
        %s305 = sand.u32 %s168, 1
        %s306 = smul.addr %s305, 8
        %s307 = scalar_lea.vmem [#allocation8], %s306
        %p308 = scmp.lt.s32.totalorder %s28, 0
        %s309 = scalar_select %p308, %s28, 0
        %s310 = scalar_lea.vmem %s2, %s309
        %v312 = vld [vmem:[%s270] sm:$0xff]
        %v313 = vpack.c.bf16 %v312, %v312
        %v314 = vld [vmem:[#allocation5] sm:$0xf]
        %v315 = vld [vmem:[#allocation5 + $0x4] sm:$0xf]
        %v316 = vld [vmem:[#allocation5 + $0x8] sm:$0xf]
        %v317 = vld [vmem:[#allocation5 + $0xc] sm:$0xf]
        %v318 = vld [vmem:[#allocation5 + $0x10] sm:$0xf]
        %v319 = vld [vmem:[#allocation5 + $0x14] sm:$0xf]
        %v320 = vld [vmem:[#allocation5 + $0x18] sm:$0xf]
        %v321 = vld [vmem:[#allocation5 + $0x1c] sm:$0xf]
        %v322 = vld [vmem:[#allocation5 + $0x20] sm:$0xf]
        %v323 = vld [vmem:[#allocation5 + $0x24] sm:$0xf]
        %v324 = vld [vmem:[#allocation5 + $0x28] sm:$0xf]
        %v325 = vld [vmem:[#allocation5 + $0x2c] sm:$0xf]
        %v326 = vld [vmem:[#allocation5 + $0x30] sm:$0xf]
        %v327 = vld [vmem:[#allocation5 + $0x34] sm:$0xf]
        %v328 = vld [vmem:[#allocation5 + $0x38] sm:$0xf]
        %v329 = vld [vmem:[#allocation5 + $0x3c] sm:$0xf]
        %v330 = vld [vmem:[%s310] sm:$0x1]
        %v332 = vlaneseq
        %v333 = vshrl.u32 %v332, 7
        %v334 = vsub.s32 0, %v333
        %v335 = vrot.slane %v330, %v334
        %v353 = vunpack.c.l.b16 %v314
        %v354 = vunpack.c.l.b16 %v315
        %v355 = vunpack.c.l.b16 %v316
        %v356 = vunpack.c.l.b16 %v317
        %v357 = vunpack.c.l.b16 %v318
        %v358 = vunpack.c.l.b16 %v319
        %v359 = vunpack.c.l.b16 %v320
        %v360 = vunpack.c.l.b16 %v321
        %v361 = vunpack.c.l.b16 %v322
        %v362 = vunpack.c.l.b16 %v323
        %v363 = vunpack.c.l.b16 %v324
        %v364 = vunpack.c.l.b16 %v325
        %v365 = vunpack.c.l.b16 %v326
        %v366 = vunpack.c.l.b16 %v327
        %v367 = vunpack.c.l.b16 %v328
        %v368 = vunpack.c.l.b16 %v329
        %v369 = vpack.c.b16 %v354, %v353
        %v370 = vpack.c.b16 %v356, %v355
        %v371 = vpack.c.b16 %v358, %v357
        %v372 = vpack.c.b16 %v360, %v359
        %v373 = vpack.c.b16 %v362, %v361
        %v374 = vpack.c.b16 %v364, %v363
        %v375 = vpack.c.b16 %v366, %v365
        %v376 = vpack.c.b16 %v368, %v367
        %385 = vmatprep.subr.bf16.mxu0 0
        %386 = vmatpush1.bf16.msra.mxu0 %v376
        %387 = vmatprep.subr.bf16.mxu0 0
        %388 = vmatpush1.bf16.msra.mxu0 %v375
        %389 = vmatprep.subr.bf16.mxu0 0
        %390 = vmatpush1.bf16.msra.mxu0 %v374
        %391 = vmatprep.subr.bf16.mxu0 0
        %392 = vmatpush1.bf16.msra.mxu0 %v373
        %393 = vmatprep.subr.bf16.mxu0 0
        %394 = vmatpush1.bf16.msra.mxu0 %v372
        %395 = vmatprep.subr.bf16.mxu0 0
        %396 = vmatpush1.bf16.msra.mxu0 %v371
        %397 = vmatprep.subr.bf16.mxu0 0
        %398 = vmatpush1.bf16.msra.mxu0 %v370
        %399 = vmatprep.subr.bf16.mxu0 0
        %400 = vmatpush1.bf16.msra.mxu0 %v369
        %401 = vmatprep.subr.bf16.mxu0 0
        %402 = vmatpush2.bf16.msra.mxu0 0
        %403 = vmatprep.subr.bf16.mxu0 0
        %404 = vmatpush2.bf16.msra.mxu0 0
        %405 = vmatprep.subr.bf16.mxu0 0
        %406 = vmatpush2.bf16.msra.mxu0 0
        %407 = vmatprep.subr.bf16.mxu0 0
        %408 = vmatpush2.bf16.msra.mxu0 0
        %409 = vmatprep.subr.bf16.mxu0 0
        %410 = vmatpush2.bf16.msra.mxu0 0
        %411 = vmatprep.subr.bf16.mxu0 0
        %412 = vmatpush2.bf16.msra.mxu0 0
        %413 = vmatprep.subr.bf16.mxu0 0
        %414 = vmatpush2.bf16.msra.mxu0 0
        %415 = vmatprep.subr.bf16.mxu0 0
        %416 = vmatpush2.bf16.msra.mxu0 0
        %417 = vmatprep.mubr.bf16.mxu0 0
        %418 = vmatmul.mubr.bf16.gmra.mxu0 %v313
        %v419 = vpop.f32.mrf.mxu0
        %v420 = vadd.f32 %v335, %v419
        %v421 = vpop.f32.mrf.mxu0
        %v422 = vpop.f32.mrf.mxu0
        %v423 = vpop.f32.mrf.mxu0
        %424 = vdwg.mxu0
        %v425 = vmax.f32 %v420, 0.0
        %v426 = vpack.c.bf16 %v425, %v425
        %v427 = vld [vmem:[#allocation7] sm:$0xf]
        %v428 = vld [vmem:[#allocation7 + $0x4] sm:$0xf]
        %v429 = vld [vmem:[#allocation7 + $0x8] sm:$0xf]
        %v430 = vld [vmem:[#allocation7 + $0xc] sm:$0xf]
        %v431 = vld [vmem:[#allocation7 + $0x10] sm:$0xf]
        %v432 = vld [vmem:[#allocation7 + $0x14] sm:$0xf]
        %v433 = vld [vmem:[#allocation7 + $0x18] sm:$0xf]
        %v434 = vld [vmem:[#allocation7 + $0x1c] sm:$0xf]
        %v435 = vld [vmem:[#allocation7 + $0x20] sm:$0xf]
        %v436 = vld [vmem:[#allocation7 + $0x24] sm:$0xf]
        %v437 = vld [vmem:[#allocation7 + $0x28] sm:$0xf]
        %v438 = vld [vmem:[#allocation7 + $0x2c] sm:$0xf]
        %v439 = vld [vmem:[#allocation7 + $0x30] sm:$0xf]
        %v440 = vld [vmem:[#allocation7 + $0x34] sm:$0xf]
        %v441 = vld [vmem:[#allocation7 + $0x38] sm:$0xf]
        %v442 = vld [vmem:[#allocation7 + $0x3c] sm:$0xf]
        %v459 = vunpack.c.l.b16 %v427
        %v460 = vunpack.c.l.b16 %v428
        %v461 = vunpack.c.l.b16 %v429
        %v462 = vunpack.c.l.b16 %v430
        %v463 = vunpack.c.l.b16 %v431
        %v464 = vunpack.c.l.b16 %v432
        %v465 = vunpack.c.l.b16 %v433
        %v466 = vunpack.c.l.b16 %v434
        %v467 = vunpack.c.l.b16 %v435
        %v468 = vunpack.c.l.b16 %v436
        %v469 = vunpack.c.l.b16 %v437
        %v470 = vunpack.c.l.b16 %v438
        %v471 = vunpack.c.l.b16 %v439
        %v472 = vunpack.c.l.b16 %v440
        %v473 = vunpack.c.l.b16 %v441
        %v474 = vunpack.c.l.b16 %v442
        %v475 = vpack.c.b16 %v460, %v459
        %v476 = vpack.c.b16 %v462, %v461
        %v477 = vpack.c.b16 %v464, %v463
        %v478 = vpack.c.b16 %v466, %v465
        %v479 = vpack.c.b16 %v468, %v467
        %v480 = vpack.c.b16 %v470, %v469
        %v481 = vpack.c.b16 %v472, %v471
        %v482 = vpack.c.b16 %v474, %v473
        %491 = vmatprep.subr.bf16.mxu0 0
        %492 = vmatpush1.bf16.msra.mxu0 %v482
        %493 = vmatprep.subr.bf16.mxu0 0
        %494 = vmatpush1.bf16.msra.mxu0 %v481
        %495 = vmatprep.subr.bf16.mxu0 0
        %496 = vmatpush1.bf16.msra.mxu0 %v480
        %497 = vmatprep.subr.bf16.mxu0 0
        %498 = vmatpush1.bf16.msra.mxu0 %v479
        %499 = vmatprep.subr.bf16.mxu0 0
        %500 = vmatpush1.bf16.msra.mxu0 %v478
        %501 = vmatprep.subr.bf16.mxu0 0
        %502 = vmatpush1.bf16.msra.mxu0 %v477
        %503 = vmatprep.subr.bf16.mxu0 0
        %504 = vmatpush1.bf16.msra.mxu0 %v476
        %505 = vmatprep.subr.bf16.mxu0 0
        %506 = vmatpush1.bf16.msra.mxu0 %v475
        %507 = vmatprep.subr.bf16.mxu0 0
        %508 = vmatpush2.bf16.msra.mxu0 0
        %509 = vmatprep.subr.bf16.mxu0 0
        %510 = vmatpush2.bf16.msra.mxu0 0
        %511 = vmatprep.subr.bf16.mxu0 0
        %512 = vmatpush2.bf16.msra.mxu0 0
        %513 = vmatprep.subr.bf16.mxu0 0
        %514 = vmatpush2.bf16.msra.mxu0 0
        %515 = vmatprep.subr.bf16.mxu0 0
        %516 = vmatpush2.bf16.msra.mxu0 0
        %517 = vmatprep.subr.bf16.mxu0 0
        %518 = vmatpush2.bf16.msra.mxu0 0
        %519 = vmatprep.subr.bf16.mxu0 0
        %520 = vmatpush2.bf16.msra.mxu0 0
        %521 = vmatprep.subr.bf16.mxu0 0
        %522 = vmatpush2.bf16.msra.mxu0 0
        %523 = vmatprep.mubr.bf16.mxu0 0
        %524 = vmatmul.mubr.bf16.gmra.mxu0 %v426
        %v525 = vpop.f32.mrf.mxu0
        %v526 = vadd.f32 0.0, %v525
        %v527 = vpop.f32.mrf.mxu0
        %v528 = vpop.f32.mrf.mxu0
        %v529 = vpop.f32.mrf.mxu0
        %530 = vdwg.mxu0
        %v531 = vld [vmem:[%s4] sm:$0x7]
        %v532 = vadd.f32 %v312, %v526
        %v533 = vlaneseq
        %v534 = vshrl.u32 %v533, 7
        %v535 = vsub.s32 0, %v534
        %v536 = vrot.slane %v531, %v535
        %v537 = vadd.f32 %v532, %v536
        %538 = vadd.xlane.f32.xlu0 %v537
        %v539 = vpop.xlane.xlu0 %538
        %v540 = vmul.f32 %v539, 0.03125
        %v541 = vsub.f32 %v537, %v540
        %v542 = vmul.f32 %v541, %v541
        %v543 = vlaneseq
        %v544 = vand.u32 %v543, 127
        %vm545 = vcmp.lt.s32.totalorder %v544, 32
        %v546 = vsel %vm545, %v542, 0.0
        %547 = vadd.xlane.f32.xlu0 %v546
        %v548 = vpop.xlane.xlu0 %547
        %v549 = vmul.f32 %v548, 0.03125
        %v550 = vadd.f32 %v549, 1e-06
        %v551 = vrsqrt.pop %v550
        %v552 = vmul.f32 %v541, %v551
        %v553 = vlaneseq
        %v554 = vshrl.u32 %v553, 7
        %v555 = vsub.s32 1, %v554
        %v556 = vrot.slane %v531, %v555
        %v557 = vmul.f32 %v552, %v556
        %v558 = vlaneseq
        %v559 = vshrl.u32 %v558, 7
        %v560 = vsub.s32 2, %v559
        %v561 = vrot.slane %v531, %v560
        %v562 = vadd.f32 %v557, %v561
        %563 = vst [vmem:[%s307] sm:$0xff] %v562
        %s564 = sand.u32 %s168, 1
        %s565 = scalar_lea.sflag [#allocation4], %s564
        %s566 = sand.u32 %s168, 1
        %s567 = smul.addr %s566, 8
        %s568 = scalar_lea.vmem [#allocation8], %s567
        // Predicated region
        $region53: #{tpu_custom_call.1} parent=39 // pred_check
          %p569 = pneg %p178
        $region54: #{tpu_custom_call.1} parent=39 // pred_check_branch
          %571 = sbr.rel (%p569) target = $region56
        $region55: #{tpu_custom_call.1} parent=39 // pred_region
          %s573 = ssub.s32 128, 128
          %574 = vsyncadd %s565, %s573
          %s575 = smul.addr %s27, 128
          %s576 = scalar_lea.hbm %s5, %s575
          %s578 = sshll.u32 %s568, 4
          %s579 = int_to_ptr.vmem [resolvable:$true] %s578
          %581 = dma.vmem_to_hbm [thread:$0]  %s579, 128, %s576, %s565
        $region56: #{tpu_custom_call.1} parent=39 // pred_fallthru
          _
      $region40: #{tpu_custom_call.1} parent=5 // pred_fallthru
        _
      %p582 = scmp.le.s32.totalorder 2, %s18
      // Predicated region
      $region57: #{tpu_custom_call.1} parent=5 // pred_check
        %p583 = pneg %p582
      $region58: #{tpu_custom_call.1} parent=5 // pred_check_branch
        %585 = sbr.rel (%p583) target = $region60
      $region59: #{tpu_custom_call.1} parent=5 // pred_region
        %s586 = ssub.s32 %s18, 2
        // Predicated region
        $region61: #{tpu_custom_call.1} parent=59 // pred_check
          %p587 = pneg %p184
        $region62: #{tpu_custom_call.1} parent=59 // pred_check_branch
          %589 = sbr.rel (%p587) target = $region64
        $region63: #{tpu_custom_call.1} parent=59 // pred_region
          %s590 = sand.u32 %s169, 1
          %s591 = scalar_lea.sflag [#allocation4], %s590
          %s592 = sand.u32 %s169, 1
          %s593 = smul.addr %s592, 8
          %s594 = scalar_lea.vmem [#allocation8], %s593
          %595 = dma.done %s591, 128
        $region64: #{tpu_custom_call.1} parent=59 // pred_fallthru
          _
      $region60: #{tpu_custom_call.1} parent=5 // pred_fallthru
        _
    $region6: #{tpu_custom_call.1} parent=1 // loop_footer
      %s22 = sadd.s32 1, %s18
    $region7: #{tpu_custom_call.1} parent=1 // loop_footer_branch
      %17 = sbr.rel target = $region3
    $region8: #{tpu_custom_call.1} parent=1 // loop_exit
      _
    %596 = vsyncpa [#allocation3], 1
    %s597 = scalar_lea.sflag [#allocation3], 1
    %598 = vsyncpa %s597, 1
    %599 = vsyncpa [#allocation6], 1
    %600 = vsyncpa [#allocation4], 1
    %s601 = scalar_lea.sflag [#allocation4], 1
    %602 = vsyncpa %s601, 1

</llo_original>
